<compile_context>
chip_gen: v7x
topology: tpu7x:2x2x1
jax: 0.10.0
libtpu: 0.0.40
codegen_flags: <defaults>
</compile_context>

<pallas_src>
import functools

import jax
import jax.numpy as jnp
from jax.experimental import pallas as pl
from jax.experimental.pallas import tpu as pltpu

_VMEM_LIMIT = 48 * 1024 * 1024  # raise scoped VMEM above the 16/32 MiB defaults


def _round_up(x, m):
    return (x + m - 1) // m * m


# ---------------------------------------------------------------------------
# GroupNorm statistics: tiled per-(sample, channel) sum / sum-of-squares.
# ---------------------------------------------------------------------------
def _gn_stats_kernel(x_ref, s_ref, sq_ref):
    @pl.when(pl.program_id(1) == 0)
    def _():
        s_ref[...] = jnp.zeros_like(s_ref)
        sq_ref[...] = jnp.zeros_like(sq_ref)

    xf = x_ref[0].astype(jnp.float32)                      # (tn, C)
    s_ref[0] += jnp.sum(xf, axis=0, keepdims=True)         # (1, C)
    sq_ref[0] += jnp.sum(xf * xf, axis=0, keepdims=True)   # (1, C)


def _gn_channel_sums(x, *, tile_n):
    """x: (B, N, C) -> per-(b, c) sum and sumsq, accumulated in f32."""
    B, N, C = x.shape
    tn = tile_n if N % tile_n == 0 else N
    s, sq = pl.pallas_call(
        _gn_stats_kernel,
        out_shape=(jax.ShapeDtypeStruct((B, 1, C), jnp.float32),
                   jax.ShapeDtypeStruct((B, 1, C), jnp.float32)),
        grid=(B, N // tn),
        in_specs=[pl.BlockSpec((1, tn, C), lambda b, n: (b, n, 0))],
        out_specs=(pl.BlockSpec((1, 1, C), lambda b, n: (b, 0, 0)),
                   pl.BlockSpec((1, 1, C), lambda b, n: (b, 0, 0))),
        compiler_params=pltpu.CompilerParams(
            dimension_semantics=("parallel", "arbitrary"),
            vmem_limit_bytes=_VMEM_LIMIT),
    )(x)
    return s[:, 0, :], sq[:, 0, :]


def _gn_scale_shift(s, sq, gamma, beta, groups, count, eps):
    """Fold channel sums into per-(b, c) affine params: y = x*scale + shift.

    NOTE: single-pass E[x^2]-E[x]^2 with f32 accumulation; fine at these
    magnitudes.  # TODO(synk): switch to two-pass / Welford if activations
    ever have huge means relative to their variance.
    """
    B, C = s.shape
    cg = C // groups
    mean = s.reshape(B, groups, cg).sum(-1) / count
    ex2 = sq.reshape(B, groups, cg).sum(-1) / count
    var = ex2 - mean * mean
    inv = jax.lax.rsqrt(var + eps)
    mean_c = jnp.repeat(mean, cg, axis=1)
    inv_c = jnp.repeat(inv, cg, axis=1)
    scale = gamma[None, :].astype(jnp.float32) * inv_c
    shift = beta[None, :].astype(jnp.float32) - mean_c * scale
    return scale, shift


# ---------------------------------------------------------------------------
# Matmul + bias (optional SiLU on the input), tiled over M with a parallel grid.
# Used for time_emb_proj (tiny) and the 1x1 shortcut conv (M = B*T*H*W).
# ---------------------------------------------------------------------------
def _linear_kernel(x_ref, w_ref, b_ref, o_ref, *, act_silu):
    x = x_ref[...]
    if act_silu:
        xf = x.astype(jnp.float32)
        x = xf * jax.nn.sigmoid(xf)
    acc = jnp.dot(x.astype(w_ref.dtype), w_ref[...],
                  preferred_element_type=jnp.float32)
    o_ref[...] = (acc + b_ref[...]).astype(o_ref.dtype)


def _linear(x, w, b, *, act_silu=False, tile_m=512, out_dtype=None):
    M, K = x.shape
    N = w.shape[1]
    out_dtype = x.dtype if out_dtype is None else out_dtype
    tm = tile_m if (M >= tile_m and M % tile_m == 0) else M
    kern = functools.partial(_linear_kernel, act_silu=act_silu)
    return pl.pallas_call(
        kern,
        out_shape=jax.ShapeDtypeStruct((M, N), out_dtype),
        grid=(M // tm,),
        in_specs=[
            pl.BlockSpec((tm, K), lambda i: (i, 0)),
            pl.BlockSpec((K, N), lambda i: (0, 0)),
            pl.BlockSpec((1, N), lambda i: (0, 0)),
        ],
        out_specs=pl.BlockSpec((tm, N), lambda i: (i, 0)),
        compiler_params=pltpu.CompilerParams(
            dimension_semantics=("parallel",),
            vmem_limit_bytes=_VMEM_LIMIT),
    )(x, w, b.reshape(1, N).astype(jnp.float32))


# ---------------------------------------------------------------------------
# Fused  SiLU(GroupNorm(x)) -> 3x3 conv  (+bias, +temb or +residual, *inv_scale)
# ---------------------------------------------------------------------------
def _pack_conv3x3_weight(w, dtype):
    """(3,3,Cin,Cout) HWIO -> (9*cs, Cout) with each tap's rows padded to a
    lane-aligned stride cs = round_up(Cin, 128) (no padding when Cin % 128 == 0)."""
    _, _, cin, cout = w.shape
    cs = _round_up(cin, 128)
    taps = w.reshape(9, cin, cout)
    if cs != cin:
        taps = jnp.zeros((9, cs, cout), w.dtype).at[:, :cin, :].set(taps)
    return taps.reshape(9 * cs, cout).astype(dtype)


def _gn_silu_conv_kernel(*refs, H, W, th, cin, cs, has_temb, has_res, inv_scale):
    x_ref, scale_ref, shift_ref, w_ref, b_ref = refs[:5]
    pos = 5
    temb_ref = res_ref = None
    if has_temb:
        temb_ref = refs[pos]
        pos += 1
    if has_res:
        res_ref = refs[pos]
        pos += 1
    o_ref, yp_ref, col_ref = refs[pos], refs[pos + 1], refs[pos + 2]

    hb = pl.program_id(1)

    # Once per frame: normalize + SiLU the whole frame (f32 VPU math) and stage
    # it into a zero-padded VMEM scratch -> in-kernel halo, no HBM pad pass and
    # no GroupNorm activation round-trip through HBM.
    @pl.when(hb == 0)
    def _():
        xf = x_ref[0].astype(jnp.float32)                 # (H*W, Cin)
        y = xf * scale_ref[...] + shift_ref[...]
        y = y * jax.nn.sigmoid(y)                         # SiLU
        yp_ref[...] = jnp.zeros(yp_ref.shape, yp_ref.dtype)
        yp_ref[1:H + 1, 1:W + 1, :] = y.reshape(H, W, cin).astype(yp_ref.dtype)
        if cs != cin:  # trace-time branch: zero K-padding columns (stay zero)
            col_ref[...] = jnp.zeros(col_ref.shape, col_ref.dtype)

    # im2col for this row block, then ONE MXU matmul with K = 9*cs.
    r0 = pl.multiple_of(hb * th, th)
    for t in range(9):
        kh, kw = divmod(t, 3)
        patch = yp_ref[pl.ds(r0 + kh, th), pl.ds(kw, W), :]      # (th, W, Cin)
        col_ref[:, t * cs:t * cs + cin] = patch.reshape(th * W, cin)

    acc = jnp.dot(col_ref[...], w_ref[...], preferred_element_type=jnp.float32)
    acc = acc + b_ref[...]
    if has_temb:
        acc = acc + temb_ref[...]                 # broadcast time-embedding add
    if has_res:
        acc = acc + res_ref[0].astype(jnp.float32)  # fused residual add
    if inv_scale != 1.0:
        acc = acc * inv_scale
    o_ref[0] = acc.astype(o_ref.dtype)


def _gn_silu_conv3x3(x, scale, shift, w_packed, bias, *, temb, residual,
                     inv_scale, T, H, W, block_h, out_dtype, compute_dtype):
    """x: (B*T, H*W, Cin) frames; scale/shift: (B, Cin); w_packed: (9*cs, Cout)."""
    NF, HW, Cin = x.shape
    K, Cout = w_packed.shape
    cs = K // 9
    th = block_h if H % block_h == 0 else H
    HB = H // th
    has_temb = temb is not None
    has_res = residual is not None

    in_specs = [
        pl.BlockSpec((1, HW, Cin), lambda n, hb: (n, 0, 0)),      # frame (resident)
        pl.BlockSpec((1, Cin), lambda n, hb: (n // T, 0)),        # GN scale (per b)
        pl.BlockSpec((1, Cin), lambda n, hb: (n // T, 0)),        # GN shift (per b)
        pl.BlockSpec((K, Cout), lambda n, hb: (0, 0)),            # packed weight
        pl.BlockSpec((1, Cout), lambda n, hb: (0, 0)),            # conv bias
    ]
    args = [x, scale, shift, w_packed, bias.reshape(1, Cout).astype(jnp.float32)]
    if has_temb:
        in_specs.append(pl.BlockSpec((1, Cout), lambda n, hb: (n // T, 0)))
        args.append(temb)
    if has_res:
        in_specs.append(pl.BlockSpec((1, th * W, Cout), lambda n, hb: (n, hb, 0)))
        args.append(residual)

    kern = functools.partial(_gn_silu_conv_kernel, H=H, W=W, th=th, cin=Cin,
                             cs=cs, has_temb=has_temb, has_res=has_res,
                             inv_scale=float(inv_scale))
    return pl.pallas_call(
        kern,
        out_shape=jax.ShapeDtypeStruct((NF, HW, Cout), out_dtype),
        grid=(NF, HB),
        in_specs=in_specs,
        out_specs=pl.BlockSpec((1, th * W, Cout), lambda n, hb: (n, hb, 0)),
        scratch_shapes=[
            pltpu.VMEM((H + 2, W + 2, Cin), compute_dtype),  # padded SiLU(GN(x))
            pltpu.VMEM((th * W, K), compute_dtype),          # im2col LHS, one row block
        ],
        compiler_params=pltpu.CompilerParams(
            dimension_semantics=("parallel", "arbitrary"),
            vmem_limit_bytes=_VMEM_LIMIT),
    )(*args)


# ---------------------------------------------------------------------------
# ResnetBlock3D forward (time_embedding_norm='default', swish, dropout=0.0).
# ---------------------------------------------------------------------------
def resnet_block_3d_forward(x, temb, params, *, groups=16, groups_out=None,
                            eps=1e-6, output_scale_factor=1.0,
                            compute_dtype=jnp.bfloat16, block_h=8,
                            gn_tile=512, shortcut_tile=512):
    if groups_out is None:
        groups_out = groups
    B, Cin, T, H, W = x.shape
    Cout = params["w1"].shape[-1]
    HW = H * W
    N = T * HW
    cdt = compute_dtype

    # NCTHW -> per-frame channels-last with flattened spatial (done once by XLA).
    x_cl = jnp.transpose(x, (0, 2, 3, 4, 1)).reshape(B * T, HW, Cin).astype(cdt)

    # GroupNorm1 statistics (tiled) -> per-(b, c) scale/shift.
    s1, sq1 = _gn_channel_sums(x_cl.reshape(B, N, Cin), tile_n=gn_tile)
    scale1, shift1 = _gn_scale_shift(s1, sq1, params["g1"], params["b1"],
                                     groups, N * (Cin // groups), eps)

    # time_emb_proj(SiLU(temb)) -- tiny (B, Tc) x (Tc, Cout), kept in f32.
    t_proj = None
    if temb is not None:
        t_proj = _linear(temb.astype(jnp.float32),
                         params["wt"].astype(jnp.float32), params["bt"],
                         act_silu=True, out_dtype=jnp.float32)
    # TODO(synk): time_embedding_norm='scale_shift' variant not implemented
    # (module default is 'default', which is what this follows).

    # Fused: SiLU(GN1(x)) -> conv1 (+bias, +temb), one HBM round trip.
    w1 = _pack_conv3x3_weight(params["w1"], cdt)
    h1 = _gn_silu_conv3x3(x_cl, scale1, shift1, w1, params["bc1"],
                          temb=t_proj, residual=None, inv_scale=1.0,
                          T=T, H=H, W=W, block_h=block_h,
                          out_dtype=cdt, compute_dtype=cdt)

    # GroupNorm2 statistics on conv1 output (temb already folded in).
    s2, sq2 = _gn_channel_sums(h1.reshape(B, N, Cout), tile_n=gn_tile)
    scale2, shift2 = _gn_scale_shift(s2, sq2, params["g2"], params["b2"],
                                     groups_out, N * (Cout // groups_out), eps)

    # 1x1 shortcut conv as an M-tiled matmul (only when in/out channels differ).
    if "ws" in params:
        sc = _linear(x_cl.reshape(B * T * HW, Cin), params["ws"].astype(cdt),
                     params["bs"], act_silu=False, out_dtype=cdt,
                     tile_m=shortcut_tile).reshape(B * T, HW, Cout)
    else:
        sc = x_cl  # identity shortcut (Cin == Cout)

    # Fused: SiLU(GN2(h1)) -> conv2 (+bias) + shortcut, * 1/output_scale_factor.
    # (dropout p=0.0 is the identity and is omitted)
    w2 = _pack_conv3x3_weight(params["w2"], cdt)
    out = _gn_silu_conv3x3(h1, scale2, shift2, w2, params["bc2"],
                           temb=None, residual=sc,
                           inv_scale=1.0 / float(output_scale_factor),
                           T=T, H=H, W=W, block_h=block_h,
                           out_dtype=jnp.float32, compute_dtype=cdt)

    out = out.reshape(B, T, H, W, Cout)
    return jnp.transpose(out, (0, 4, 1, 2, 3))  # back to (B, Cout, T, H, W)


# ---------------------------------------------------------------------------
# Pure-JAX reference (for correctness check)
# ---------------------------------------------------------------------------
def reference_forward(x, temb, params, *, groups, groups_out, eps, scale):
    def gn(x_cl, gamma, beta, G):
        B, T, H, W, C = x_cl.shape
        cg = C // G
        xg = x_cl.reshape(B, T, H, W, G, cg)
        mean = xg.mean(axis=(1, 2, 3, 5), keepdims=True)
        var = ((xg - mean) ** 2).mean(axis=(1, 2, 3, 5), keepdims=True)
        xn = ((xg - mean) / jnp.sqrt(var + eps)).reshape(B, T, H, W, C)
        return xn * gamma + beta

    def silu(v):
        return v * jax.nn.sigmoid(v)

    def conv(x_cl, w, b):
        B, T, H, W, C = x_cl.shape
        xf = x_cl.reshape(B * T, H, W, C)
        y = jax.lax.conv_general_dilated(
            xf, w, (1, 1), "SAME",
            dimension_numbers=("NHWC", "HWIO", "NHWC"),
            precision=jax.lax.Precision.HIGHEST) + b
        return y.reshape(B, T, H, W, -1)

    x_cl = jnp.transpose(x, (0, 2, 3, 4, 1)).astype(jnp.float32)
    h = silu(gn(x_cl, params["g1"], params["b1"], groups))
    h = conv(h, params["w1"], params["bc1"])
    t = jnp.dot(silu(temb), params["wt"],
                precision=jax.lax.Precision.HIGHEST) + params["bt"]
    h = h + t[:, None, None, None, :]
    h = silu(gn(h, params["g2"], params["b2"], groups_out))
    h = conv(h, params["w2"], params["bc2"])
    sc = jnp.dot(x_cl, params["ws"],
                 precision=jax.lax.Precision.HIGHEST) + params["bs"]
    out = (sc + h) / scale
    return jnp.transpose(out, (0, 4, 1, 2, 3))


if __name__ == "__main__":
    B, Cin, Cout, T, H, W = 2, 16, 32, 4, 16, 16
    Tc = 32                    # temb_channels
    groups = 16
    eps = 1e-6
    scale = 1.0                # output_scale_factor

    key = jax.random.PRNGKey(0)
    ks = jax.random.split(key, 16)

    def nrm(k, shape, s=0.1):
        return s * jax.random.normal(k, shape, jnp.float32)

    params = dict(
        g1=1.0 + nrm(ks[0], (Cin,)), b1=nrm(ks[1], (Cin,)),
        w1=nrm(ks[2], (3, 3, Cin, Cout)), bc1=nrm(ks[3], (Cout,)),
        wt=nrm(ks[4], (Tc, Cout)), bt=nrm(ks[5], (Cout,)),
        g2=1.0 + nrm(ks[6], (Cout,)), b2=nrm(ks[7], (Cout,)),
        w2=nrm(ks[8], (3, 3, Cout, Cout)), bc2=nrm(ks[9], (Cout,)),
        ws=nrm(ks[10], (Cin, Cout)), bs=nrm(ks[11], (Cout,)),
    )
    x = jax.random.normal(ks[12], (B, Cin, T, H, W), jnp.float32)
    temb = jax.random.normal(ks[13], (B, Tc), jnp.float32)

    ref = jax.block_until_ready(reference_forward(
        x, temb, params, groups=groups, groups_out=groups, eps=eps, scale=scale))

    # f32 compute path: tight correctness check against the f32 reference.
    out_f32 = jax.block_until_ready(resnet_block_3d_forward(
        x, temb, params, groups=groups, groups_out=groups, eps=eps,
        output_scale_factor=scale, compute_dtype=jnp.float32, block_h=8))
    assert out_f32.shape == (B, Cout, T, H, W)
    err32 = float(jnp.max(jnp.abs(out_f32 - ref)))
    if not bool(jnp.allclose(out_f32, ref, atol=3e-3, rtol=3e-3)):
        raise AssertionError(f"f32 mismatch vs reference, max abs err={err32}")

    # bf16-at-the-MXU path (f32 accumulation, f32 GN/SiLU math): loose check.
    out_bf16 = jax.block_until_ready(resnet_block_3d_forward(
        x, temb, params, groups=groups, groups_out=groups, eps=eps,
        output_scale_factor=scale, compute_dtype=jnp.bfloat16, block_h=8))
    err_bf = float(jnp.max(jnp.abs(out_bf16 - ref)))
    if err_bf > 0.3:
        raise AssertionError(f"bf16 path drifted too far, max abs err={err_bf}")

    print("KERNEL_OK")
</pallas_src>

<mosaic_0001>
module attributes {stable_mosaic.version = 11 : i64} {
  func.func @_gn_stats_kernel(%arg0: i32, %arg1: i32, %arg2: memref<1x512x16xf32, #tpu.memory_space<vmem>>, %arg3: memref<1x1x16xf32, #tpu.memory_space<vmem>>, %arg4: memref<1x1x16xf32, #tpu.memory_space<vmem>>) attributes {dimension_semantics = [#tpu.dimension_semantics<parallel>, #tpu.dimension_semantics<arbitrary>], iteration_bounds = array<i64: 2, 2>, scalar_prefetch = 0 : i64, scratch_operands = 0 : i64, tpu.core_type = #tpu.core_type<tc>, window_params = [{transform_indices = @transform_0, window_bounds = array<i64: 1, 512, 16>}, {transform_indices = @transform_1, window_bounds = array<i64: 1, 1, 16>}, {transform_indices = @transform_2, window_bounds = array<i64: 1, 1, 16>}]} {
    %c0_i32 = arith.constant 0 : i32
    %0 = arith.cmpi eq, %arg1, %c0_i32 : i32
    %1 = arith.extui %0 : i1 to i32
    %c0_i32_0 = arith.constant 0 : i32
    %2 = arith.cmpi ne, %1, %c0_i32_0 : i32
    scf.if %2 {
      %cst_16 = arith.constant 0.000000e+00 : f32
      %22 = vector.broadcast %cst_16 : f32 to vector<1x1x16xf32>
      %c0_17 = arith.constant 0 : index
      %c0_18 = arith.constant 0 : index
      %c0_19 = arith.constant 0 : index
      %23 = vector.load %arg3[%c0_17, %c0_18, %c0_19] : memref<1x1x16xf32, #tpu.memory_space<vmem>>, vector<1x1x16xf32>
      tpu.vector_store %arg3[%c0_17, %c0_18, %c0_19], %22 {strides = array<i32>} : memref<1x1x16xf32, #tpu.memory_space<vmem>>, vector<1x1x16xf32>,
      %cst_20 = arith.constant 0.000000e+00 : f32
      %24 = vector.broadcast %cst_20 : f32 to vector<1x1x16xf32>
      %c0_21 = arith.constant 0 : index
      %c0_22 = arith.constant 0 : index
      %c0_23 = arith.constant 0 : index
      %25 = vector.load %arg4[%c0_21, %c0_22, %c0_23] : memref<1x1x16xf32, #tpu.memory_space<vmem>>, vector<1x1x16xf32>
      tpu.vector_store %arg4[%c0_21, %c0_22, %c0_23], %24 {strides = array<i32>} : memref<1x1x16xf32, #tpu.memory_space<vmem>>, vector<1x1x16xf32>,
    } else {
    }
    %c0 = arith.constant 0 : index
    %c0_1 = arith.constant 0 : index
    %c0_2 = arith.constant 0 : index
    %3 = vector.load %arg2[%c0, %c0_1, %c0_2] : memref<1x512x16xf32, #tpu.memory_space<vmem>>, vector<1x512x16xf32>
    %4 = vector.shape_cast %3 : vector<1x512x16xf32> to vector<512x16xf32>
    %c0_3 = arith.constant 0 : index
    %c0_4 = arith.constant 0 : index
    %c0_5 = arith.constant 0 : index
    %5 = vector.load %arg3[%c0_3, %c0_4, %c0_5] : memref<1x1x16xf32, #tpu.memory_space<vmem>>, vector<1x1x16xf32>
    %6 = vector.shape_cast %5 : vector<1x1x16xf32> to vector<1x16xf32>
    %cst = arith.constant dense<0.000000e+00> : vector<16xf32>
    %7 = vector.multi_reduction <add>, %4, %cst [0] : vector<512x16xf32> to vector<16xf32>
    %8 = vector.shape_cast %7 : vector<16xf32> to vector<1x16xf32>
    %9 = arith.addf %6, %8 : vector<1x16xf32>
    %c0_6 = arith.constant 0 : index
    %c0_7 = arith.constant 0 : index
    %c0_8 = arith.constant 0 : index
    %10 = vector.load %arg3[%c0_6, %c0_7, %c0_8] : memref<1x1x16xf32, #tpu.memory_space<vmem>>, vector<1x1x16xf32>
    %11 = vector.shape_cast %10 : vector<1x1x16xf32> to vector<1x16xf32>
    %12 = vector.shape_cast %9 : vector<1x16xf32> to vector<1x1x16xf32>
    tpu.vector_store %arg3[%c0_6, %c0_7, %c0_8], %12 {strides = array<i32>} : memref<1x1x16xf32, #tpu.memory_space<vmem>>, vector<1x1x16xf32>,
    %c0_9 = arith.constant 0 : index
    %c0_10 = arith.constant 0 : index
    %c0_11 = arith.constant 0 : index
    %13 = vector.load %arg4[%c0_9, %c0_10, %c0_11] : memref<1x1x16xf32, #tpu.memory_space<vmem>>, vector<1x1x16xf32>
    %14 = vector.shape_cast %13 : vector<1x1x16xf32> to vector<1x16xf32>
    %15 = arith.mulf %4, %4 : vector<512x16xf32>
    %cst_12 = arith.constant dense<0.000000e+00> : vector<16xf32>
    %16 = vector.multi_reduction <add>, %15, %cst_12 [0] : vector<512x16xf32> to vector<16xf32>
    %17 = vector.shape_cast %16 : vector<16xf32> to vector<1x16xf32>
    %18 = arith.addf %14, %17 : vector<1x16xf32>
    %c0_13 = arith.constant 0 : index
    %c0_14 = arith.constant 0 : index
    %c0_15 = arith.constant 0 : index
    %19 = vector.load %arg4[%c0_13, %c0_14, %c0_15] : memref<1x1x16xf32, #tpu.memory_space<vmem>>, vector<1x1x16xf32>
    %20 = vector.shape_cast %19 : vector<1x1x16xf32> to vector<1x16xf32>
    %21 = vector.shape_cast %18 : vector<1x16xf32> to vector<1x1x16xf32>
    tpu.vector_store %arg4[%c0_13, %c0_14, %c0_15], %21 {strides = array<i32>} : memref<1x1x16xf32, #tpu.memory_space<vmem>>, vector<1x1x16xf32>,
    return
  }
  func.func @transform_0(%arg0: i32, %arg1: i32) -> (i32, i32, i32) {
    %c0_i32 = arith.constant 0 : i32
    %c0_i32_0 = arith.constant 0 : i32
    return %arg0, %arg1, %c0_i32 : i32, i32, i32
  }
  func.func @transform_1(%arg0: i32, %arg1: i32) -> (i32, i32, i32) {
    %c0_i32 = arith.constant 0 : i32
    %c0_i32_0 = arith.constant 0 : i32
    %c0_i32_1 = arith.constant 0 : i32
    return %arg0, %c0_i32, %c0_i32_0 : i32, i32, i32
  }
  func.func @transform_2(%arg0: i32, %arg1: i32) -> (i32, i32, i32) {
    %c0_i32 = arith.constant 0 : i32
    %c0_i32_0 = arith.constant 0 : i32
    %c0_i32_1 = arith.constant 0 : i32
    return %arg0, %c0_i32, %c0_i32_0 : i32, i32, i32
  }
}

</mosaic_0001>

<llo_original>
// kernel: tpu_custom_call.1
$region0: #{tpu_custom_call.1}
  #allocation0 [shape = 'u32[]', space=smem, size = 0x4, offset = 0x4, fixed_abs, tag = 'smem constant byte address 0x4 - core index']
  #allocation1 [shape = 'u32[144,128]{1,0:T(1,128)}', space=vmem, size = 0x12000, scoped, tag = 'internal scratch']
  %s0 = inlined_call_operand.vmem [shape: f32[2,1024,16], index: 0, kind: input, shape index: {}]
  %s1 = inlined_call_operand.hbm [shape: f32[2,1,16], index: 1, kind: output, shape index: {0}]
  %s2 = inlined_call_operand.hbm [shape: f32[2,1,16], index: 2, kind: output, shape index: {1}]
  %3 = xla_tuple %s1, %s2
  %s4 = sld [smem:[#allocation0]]
  $region49: #{tpu_custom_call.1} parent=0
    _
  %s6 = ssub.s32 1, %s4
  %s7 = scalar_select 0, %s6, %s4
  $region1: #{tpu_custom_call.1} parent=0
    #allocation2 [shape = 'u8[1024]{0}', space=vmem, size = 0x400, scoped, tag = 'output window, operand 0']
    #allocation3 [shape = 's32[2]{0}', space=sflag, size = 0x8, scoped, tag = 'scoped memory for tpu_custom_call.1']
    #allocation4 [shape = 'u8[1024]{0}', space=vmem, size = 0x400, scoped, tag = 'output window, operand 1']
    #allocation5 [shape = 's32[2]{0}', space=sflag, size = 0x8, scoped, tag = 'scoped memory for tpu_custom_call.1']
    %8 = vsyncpa [#allocation3], 0
    %s9 = scalar_lea.sflag [#allocation3], 1
    %10 = vsyncpa %s9, 0
    %11 = vsyncpa [#allocation5], 0
    %s12 = scalar_lea.sflag [#allocation5], 1
    %13 = vsyncpa %s12, 0
    loop: start=0, step=1, limit=6
    $region2: #{tpu_custom_call.1} parent=1 // loop_pre_header
      _
    $region3: #{tpu_custom_call.1} parent=1 // loop_header
      %s15 = sphi 0, %s19
      %p16 = scmp.ge.s32.totalorder %s15, 6
      %s22 = sphi 0, %s34
      %s23 = sphi 0, %s30
      %s24 = sphi 0, %s22
      %s25 = sphi 0, %s23
      %s26 = sphi 0, %s24
      %s27 = sphi 0, %s25
      %s39 = sphi 0, %s41
      %s42 = sphi 0, %s39
      %s43 = sphi 0, %s42
      %s59 = sphi 0, %s43
      %s65 = sphi 0, %s67
      %s68 = sphi 0, %s65
      %s69 = sphi 0, %s68
      %s85 = sphi 0, %s69
      %s91 = sphi 0, %s93
      %s94 = sphi 0, %s91
      %s95 = sphi 0, %s94
      %s111 = sphi 0, %s95
    $region4: #{tpu_custom_call.1} parent=1 // loop_header_branch
      %18 = sbr.rel (%p16) target = $region8
    $region5: #{tpu_custom_call.1} parent=1 // loop_body
      %s20 = ssub.s32 %s15, 1
      %s21 = ssub.s32 %s15, 2
      %s28 = sadd.s32 1, %s23
      %p29 = scmp.ge.s32.totalorder %s28, 2
      %s30 = scalar_select %p29, 0, %s28
      %s31 = sadd.s32 1, %s22
      %s32 = scalar_select %p29, %s31, %s22
      %p33 = scmp.ge.s32.totalorder %s32, 2
      %s34 = scalar_select %p33, 0, %s32
      %s35 = ssub.s32 %s22, %s34
      %s36 = ssub.s32 %s23, %s30
      %s37 = sor.u32 %s35, %s36
      %p38 = scmp.eq.s32.totalorder %s37, 0
      %s40 = sadd.s32 %s39, 1
      %s41 = scalar_select %p38, %s39, %s40
      %p44 = pneg %p38
      %p45 = scmp.eq.s32.totalorder %s15, 3
      %p46 = por %p44, %p45
      %p47 = scmp.ne.s32.totalorder %s39, %s42
      %p48 = scmp.eq.s32.totalorder %s15, 0
      %p49 = por %p47, %p48
      %p50 = scmp.ne.s32.totalorder %s39, %s42
      %p51 = scmp.eq.s32.totalorder %s20, 3
      %p52 = por %p50, %p51
      %p53 = scmp.ne.s32.totalorder %s42, %s43
      %p54 = scmp.eq.s32.totalorder %s20, 0
      %p55 = por %p53, %p54
      %p56 = scmp.ne.s32.totalorder %s42, %s43
      %p57 = scmp.eq.s32.totalorder %s21, 3
      %p58 = por %p56, %p57
      %p60 = scmp.ne.s32.totalorder %s43, %s59
      %p61 = scmp.eq.s32.totalorder %s21, 0
      %p62 = por %p60, %p61
      %s63 = ssub.s32 %s22, %s34
      %p64 = scmp.eq.s32.totalorder %s63, 0
      %s66 = sadd.s32 %s65, 1
      %s67 = scalar_select %p64, %s65, %s66
      %p70 = pneg %p64
      %p71 = scmp.eq.s32.totalorder %s15, 3
      %p72 = por %p70, %p71
      %p73 = scmp.ne.s32.totalorder %s65, %s68
      %p74 = scmp.eq.s32.totalorder %s15, 0
      %p75 = por %p73, %p74
      %p76 = scmp.ne.s32.totalorder %s65, %s68
      %p77 = scmp.eq.s32.totalorder %s20, 3
      %p78 = por %p76, %p77
      %p79 = scmp.ne.s32.totalorder %s68, %s69
      %p80 = scmp.eq.s32.totalorder %s20, 0
      %p81 = por %p79, %p80
      %p82 = scmp.ne.s32.totalorder %s68, %s69
      %p83 = scmp.eq.s32.totalorder %s21, 3
      %p84 = por %p82, %p83
      %p86 = scmp.ne.s32.totalorder %s69, %s85
      %p87 = scmp.eq.s32.totalorder %s21, 0
      %p88 = por %p86, %p87
      %s89 = ssub.s32 %s22, %s34
      %p90 = scmp.eq.s32.totalorder %s89, 0
      %s92 = sadd.s32 %s91, 1
      %s93 = scalar_select %p90, %s91, %s92
      %p96 = pneg %p90
      %p97 = scmp.eq.s32.totalorder %s15, 3
      %p98 = por %p96, %p97
      %p99 = scmp.ne.s32.totalorder %s91, %s94
      %p100 = scmp.eq.s32.totalorder %s15, 0
      %p101 = por %p99, %p100
      %p102 = scmp.ne.s32.totalorder %s91, %s94
      %p103 = scmp.eq.s32.totalorder %s20, 3
      %p104 = por %p102, %p103
      %p105 = scmp.ne.s32.totalorder %s94, %s95
      %p106 = scmp.eq.s32.totalorder %s20, 0
      %p107 = por %p105, %p106
      %p108 = scmp.ne.s32.totalorder %s94, %s95
      %p109 = scmp.eq.s32.totalorder %s21, 3
      %p110 = por %p108, %p109
      %p112 = scmp.ne.s32.totalorder %s95, %s111
      %p113 = scmp.eq.s32.totalorder %s21, 0
      %p114 = por %p112, %p113
      %p115 = scmp.le.s32.totalorder 1, %s15
      %p116 = scmp.lt.s32.totalorder %s15, 5
      %p117 = pnand %p115, %p116
      %p118 = pneg %p117
      // Predicated region
      $region9: #{tpu_custom_call.1} parent=5 // pred_check
        _
      $region10: #{tpu_custom_call.1} parent=5 // pred_check_branch
        %120 = sbr.rel (%p117) target = $region12
      $region11: #{tpu_custom_call.1} parent=5 // pred_region
        %s121 = ssub.s32 %s15, 1
      $region12: #{tpu_custom_call.1} parent=5 // pred_fallthru
        _
      %p122 = scmp.lt.s32.totalorder %s15, 4
      // Predicated region
      $region13: #{tpu_custom_call.1} parent=5 // pred_check
        %p123 = pneg %p122
      $region14: #{tpu_custom_call.1} parent=5 // pred_check_branch
        %125 = sbr.rel (%p123) target = $region16
      $region15: #{tpu_custom_call.1} parent=5 // pred_region
        // Predicated region
        $region17: #{tpu_custom_call.1} parent=15 // pred_check
          %p126 = pneg %p49
        $region18: #{tpu_custom_call.1} parent=15 // pred_check_branch
          %128 = sbr.rel (%p126) target = $region20
        $region19: #{tpu_custom_call.1} parent=15 // pred_region
          %s129 = smul.u32 64, %s23
          %p130 = scmp.lt.s32.totalorder %s22, 1
          %s131 = scalar_select %p130, %s22, 1
          %p132 = scmp.lt.s32.totalorder %s129, 127
          %s133 = scalar_select %p132, %s129, 127
          %s134 = smul.addr %s131, 128
          %s135 = sadd.s32 %s133, %s134
          %s136 = smul.addr %s135, 8
          %s137 = scalar_lea.vmem %s0, %s136
          %s138 = smul.u32 64, %s23
        $region20: #{tpu_custom_call.1} parent=15 // pred_fallthru
          _
      $region16: #{tpu_custom_call.1} parent=5 // pred_fallthru
        _
      %p139 = scmp.le.s32.totalorder 1, %s15
      %p140 = scmp.lt.s32.totalorder %s15, 5
      %p141 = pnand %p139, %p140
      %p142 = pneg %p141
      // Predicated region
      $region21: #{tpu_custom_call.1} parent=5 // pred_check
        _
      $region22: #{tpu_custom_call.1} parent=5 // pred_check_branch
        %144 = sbr.rel (%p141) target = $region24
      $region23: #{tpu_custom_call.1} parent=5 // pred_region
        %s145 = ssub.s32 %s15, 1
        %s146 = smul.u32 64, %s25
        %p147 = scmp.lt.s32.totalorder %s24, 1
        %s148 = scalar_select %p147, %s24, 1
        %p149 = scmp.lt.s32.totalorder %s146, 127
        %s150 = scalar_select %p149, %s146, 127
        %s151 = smul.addr %s148, 128
        %s152 = sadd.s32 %s150, %s151
        %s153 = smul.addr %s152, 8
        %s154 = scalar_lea.vmem %s0, %s153
        %p155 = pneg %p55
        %p156 = pneg %p52
        %p157 = pneg %p81
        %p158 = pneg %p78
        %s159 = sand.u32 %s68, 1
        %s160 = scalar_lea.sflag [#allocation3], %s159
        %s161 = sand.u32 %s68, 1
        %s162 = scalar_lea.vmem [#allocation2], %s161
        %p163 = pneg %p107
        %p164 = pneg %p104
        %s165 = sand.u32 %s94, 1
        %s166 = scalar_lea.sflag [#allocation5], %s165
        %s167 = sand.u32 %s94, 1
        %s168 = scalar_lea.vmem [#allocation4], %s167
        %s169 = smul.u32 64, %s25
        %p170 = scmp.lt.s32.totalorder %s24, 1
        %s171 = scalar_select %p170, %s24, 1
        %p172 = scmp.lt.s32.totalorder %s169, 127
        %s173 = scalar_select %p172, %s169, 127
        %s174 = smul.addr %s171, 128
        %s175 = sadd.s32 %s173, %s174
        %s176 = smul.addr %s175, 8
        %s177 = scalar_lea.vmem %s0, %s176
        %s178 = smul.u32 64, %s25
        %p179 = scmp.eq.s32.totalorder %s25, 0
        // Predicated region
        $region25: #{tpu_custom_call.1} parent=23 // pred_check
          %p180 = pneg %p179
        $region26: #{tpu_custom_call.1} parent=23 // pred_check_branch
          %182 = sbr.rel (%p180) target = $region28
        $region27: #{tpu_custom_call.1} parent=23 // pred_region
          %vm183 = vcmask 122880
          %184 = vst.msk [vmem:[%s162] sm:$0x1] %vm183, 0.0
          %185 = vst.msk [vmem:[%s168] sm:$0x1] %vm183, 0.0
        $region28: #{tpu_custom_call.1} parent=23 // pred_fallthru
          _
        %v186 = vld [vmem:[%s177] sm:$0xff]
        %v187 = vld [vmem:[%s177 + $0x8] sm:$0xff]
        %v188 = vld [vmem:[%s177 + $0x10] sm:$0xff]
        %v189 = vld [vmem:[%s177 + $0x18] sm:$0xff]
        %v190 = vld [vmem:[%s177 + $0x20] sm:$0xff]
        %v191 = vld [vmem:[%s177 + $0x28] sm:$0xff]
        %v192 = vld [vmem:[%s177 + $0x30] sm:$0xff]
        %v193 = vld [vmem:[%s177 + $0x38] sm:$0xff]
        %v194 = vld [vmem:[%s177 + $0x40] sm:$0xff]
        %v195 = vld [vmem:[%s177 + $0x48] sm:$0xff]
        %v196 = vld [vmem:[%s177 + $0x50] sm:$0xff]
        %v197 = vld [vmem:[%s177 + $0x58] sm:$0xff]
        %v198 = vld [vmem:[%s177 + $0x60] sm:$0xff]
        %v199 = vld [vmem:[%s177 + $0x68] sm:$0xff]
        %v200 = vld [vmem:[%s177 + $0x70] sm:$0xff]
        %v201 = vld [vmem:[%s177 + $0x78] sm:$0xff]
        %v202 = vld [vmem:[%s177 + $0x80] sm:$0xff]
        %v203 = vld [vmem:[%s177 + $0x88] sm:$0xff]
        %v204 = vld [vmem:[%s177 + $0x90] sm:$0xff]
        %v205 = vld [vmem:[%s177 + $0x98] sm:$0xff]
        %v206 = vld [vmem:[%s177 + $0xa0] sm:$0xff]
        %v207 = vld [vmem:[%s177 + $0xa8] sm:$0xff]
        %v208 = vld [vmem:[%s177 + $0xb0] sm:$0xff]
        %v209 = vld [vmem:[%s177 + $0xb8] sm:$0xff]
        %v210 = vld [vmem:[%s177 + $0xc0] sm:$0xff]
        %v211 = vld [vmem:[%s177 + $0xc8] sm:$0xff]
        %v212 = vld [vmem:[%s177 + $0xd0] sm:$0xff]
        %v213 = vld [vmem:[%s177 + $0xd8] sm:$0xff]
        %v214 = vld [vmem:[%s177 + $0xe0] sm:$0xff]
        %v215 = vld [vmem:[%s177 + $0xe8] sm:$0xff]
        %v216 = vld [vmem:[%s177 + $0xf0] sm:$0xff]
        %v217 = vld [vmem:[%s177 + $0xf8] sm:$0xff]
        %v218 = vld [vmem:[%s177 + $0x100] sm:$0xff]
        %v219 = vld [vmem:[%s177 + $0x108] sm:$0xff]
        %v220 = vld [vmem:[%s177 + $0x110] sm:$0xff]
        %v221 = vld [vmem:[%s177 + $0x118] sm:$0xff]
        %v222 = vld [vmem:[%s177 + $0x120] sm:$0xff]
        %v223 = vld [vmem:[%s177 + $0x128] sm:$0xff]
        %v224 = vld [vmem:[%s177 + $0x130] sm:$0xff]
        %v225 = vld [vmem:[%s177 + $0x138] sm:$0xff]
        %v226 = vld [vmem:[%s177 + $0x140] sm:$0xff]
        %v227 = vld [vmem:[%s177 + $0x148] sm:$0xff]
        %v228 = vld [vmem:[%s177 + $0x150] sm:$0xff]
        %v229 = vld [vmem:[%s177 + $0x158] sm:$0xff]
        %v230 = vld [vmem:[%s177 + $0x160] sm:$0xff]
        %v231 = vld [vmem:[%s177 + $0x168] sm:$0xff]
        %v232 = vld [vmem:[%s177 + $0x170] sm:$0xff]
        %v233 = vld [vmem:[%s177 + $0x178] sm:$0xff]
        %v234 = vld [vmem:[%s177 + $0x180] sm:$0xff]
        %v235 = vld [vmem:[%s177 + $0x188] sm:$0xff]
        %v236 = vld [vmem:[%s177 + $0x190] sm:$0xff]
        %v237 = vld [vmem:[%s177 + $0x198] sm:$0xff]
        %v238 = vld [vmem:[%s177 + $0x1a0] sm:$0xff]
        %v239 = vld [vmem:[%s177 + $0x1a8] sm:$0xff]
        %v240 = vld [vmem:[%s177 + $0x1b0] sm:$0xff]
        %v241 = vld [vmem:[%s177 + $0x1b8] sm:$0xff]
        %v242 = vld [vmem:[%s177 + $0x1c0] sm:$0xff]
        %v243 = vld [vmem:[%s177 + $0x1c8] sm:$0xff]
        %v244 = vld [vmem:[%s177 + $0x1d0] sm:$0xff]
        %v245 = vld [vmem:[%s177 + $0x1d8] sm:$0xff]
        %v246 = vld [vmem:[%s177 + $0x1e0] sm:$0xff]
        %v247 = vld [vmem:[%s177 + $0x1e8] sm:$0xff]
        %v248 = vld [vmem:[%s177 + $0x1f0] sm:$0xff]
        %v249 = vld [vmem:[%s177 + $0x1f8] sm:$0xff]
        %v250 = vld [vmem:[%s162] sm:$0x1]
        %vm251 = vcmask 130048
        %v252 = vsel %vm251, %v186, 0.0
        %v253 = vsel %vm251, %v187, 0.0
        %v254 = vadd.f32 %v252, %v253
        %v255 = vsel %vm251, %v188, 0.0
        %v256 = vadd.f32 %v254, %v255
        %v257 = vsel %vm251, %v189, 0.0
        %v258 = vadd.f32 %v256, %v257
        %v259 = vsel %vm251, %v190, 0.0
        %v260 = vadd.f32 %v258, %v259
        %v261 = vsel %vm251, %v191, 0.0
        %v262 = vadd.f32 %v260, %v261
        %v263 = vsel %vm251, %v192, 0.0
        %v264 = vadd.f32 %v262, %v263
        %v265 = vsel %vm251, %v193, 0.0
        %v266 = vadd.f32 %v264, %v265
        %v267 = vsel %vm251, %v194, 0.0
        %v268 = vadd.f32 %v266, %v267
        %v269 = vsel %vm251, %v195, 0.0
        %v270 = vadd.f32 %v268, %v269
        %v271 = vsel %vm251, %v196, 0.0
        %v272 = vadd.f32 %v270, %v271
        %v273 = vsel %vm251, %v197, 0.0
        %v274 = vadd.f32 %v272, %v273
        %v275 = vsel %vm251, %v198, 0.0
        %v276 = vadd.f32 %v274, %v275
        %v277 = vsel %vm251, %v199, 0.0
        %v278 = vadd.f32 %v276, %v277
        %v279 = vsel %vm251, %v200, 0.0
        %v280 = vadd.f32 %v278, %v279
        %v281 = vsel %vm251, %v201, 0.0
        %v282 = vadd.f32 %v280, %v281
        %v283 = vsel %vm251, %v202, 0.0
        %v284 = vadd.f32 %v282, %v283
        %v285 = vsel %vm251, %v203, 0.0
        %v286 = vadd.f32 %v284, %v285
        %v287 = vsel %vm251, %v204, 0.0
        %v288 = vadd.f32 %v286, %v287
        %v289 = vsel %vm251, %v205, 0.0
        %v290 = vadd.f32 %v288, %v289
        %v291 = vsel %vm251, %v206, 0.0
        %v292 = vadd.f32 %v290, %v291
        %v293 = vsel %vm251, %v207, 0.0
        %v294 = vadd.f32 %v292, %v293
        %v295 = vsel %vm251, %v208, 0.0
        %v296 = vadd.f32 %v294, %v295
        %v297 = vsel %vm251, %v209, 0.0
        %v298 = vadd.f32 %v296, %v297
        %v299 = vsel %vm251, %v210, 0.0
        %v300 = vadd.f32 %v298, %v299
        %v301 = vsel %vm251, %v211, 0.0
        %v302 = vadd.f32 %v300, %v301
        %v303 = vsel %vm251, %v212, 0.0
        %v304 = vadd.f32 %v302, %v303
        %v305 = vsel %vm251, %v213, 0.0
        %v306 = vadd.f32 %v304, %v305
        %v307 = vsel %vm251, %v214, 0.0
        %v308 = vadd.f32 %v306, %v307
        %v309 = vsel %vm251, %v215, 0.0
        %v310 = vadd.f32 %v308, %v309
        %v311 = vsel %vm251, %v216, 0.0
        %v312 = vadd.f32 %v310, %v311
        %v313 = vsel %vm251, %v217, 0.0
        %v314 = vadd.f32 %v312, %v313
        %v315 = vsel %vm251, %v218, 0.0
        %v316 = vadd.f32 %v314, %v315
        %v317 = vsel %vm251, %v219, 0.0
        %v318 = vadd.f32 %v316, %v317
        %v319 = vsel %vm251, %v220, 0.0
        %v320 = vadd.f32 %v318, %v319
        %v321 = vsel %vm251, %v221, 0.0
        %v322 = vadd.f32 %v320, %v321
        %v323 = vsel %vm251, %v222, 0.0
        %v324 = vadd.f32 %v322, %v323
        %v325 = vsel %vm251, %v223, 0.0
        %v326 = vadd.f32 %v324, %v325
        %v327 = vsel %vm251, %v224, 0.0
        %v328 = vadd.f32 %v326, %v327
        %v329 = vsel %vm251, %v225, 0.0
        %v330 = vadd.f32 %v328, %v329
        %v331 = vsel %vm251, %v226, 0.0
        %v332 = vadd.f32 %v330, %v331
        %v333 = vsel %vm251, %v227, 0.0
        %v334 = vadd.f32 %v332, %v333
        %v335 = vsel %vm251, %v228, 0.0
        %v336 = vadd.f32 %v334, %v335
        %v337 = vsel %vm251, %v229, 0.0
        %v338 = vadd.f32 %v336, %v337
        %v339 = vsel %vm251, %v230, 0.0
        %v340 = vadd.f32 %v338, %v339
        %v341 = vsel %vm251, %v231, 0.0
        %v342 = vadd.f32 %v340, %v341
        %v343 = vsel %vm251, %v232, 0.0
        %v344 = vadd.f32 %v342, %v343
        %v345 = vsel %vm251, %v233, 0.0
        %v346 = vadd.f32 %v344, %v345
        %v347 = vsel %vm251, %v234, 0.0
        %v348 = vadd.f32 %v346, %v347
        %v349 = vsel %vm251, %v235, 0.0
        %v350 = vadd.f32 %v348, %v349
        %v351 = vsel %vm251, %v236, 0.0
        %v352 = vadd.f32 %v350, %v351
        %v353 = vsel %vm251, %v237, 0.0
        %v354 = vadd.f32 %v352, %v353
        %v355 = vsel %vm251, %v238, 0.0
        %v356 = vadd.f32 %v354, %v355
        %v357 = vsel %vm251, %v239, 0.0
        %v358 = vadd.f32 %v356, %v357
        %v359 = vsel %vm251, %v240, 0.0
        %v360 = vadd.f32 %v358, %v359
        %v361 = vsel %vm251, %v241, 0.0
        %v362 = vadd.f32 %v360, %v361
        %v363 = vsel %vm251, %v242, 0.0
        %v364 = vadd.f32 %v362, %v363
        %v365 = vsel %vm251, %v243, 0.0
        %v366 = vadd.f32 %v364, %v365
        %v367 = vsel %vm251, %v244, 0.0
        %v368 = vadd.f32 %v366, %v367
        %v369 = vsel %vm251, %v245, 0.0
        %v370 = vadd.f32 %v368, %v369
        %v371 = vsel %vm251, %v246, 0.0
        %v372 = vadd.f32 %v370, %v371
        %v373 = vsel %vm251, %v247, 0.0
        %v374 = vadd.f32 %v372, %v373
        %v375 = vsel %vm251, %v248, 0.0
        %v376 = vadd.f32 %v374, %v375
        %v377 = vsel %vm251, %v249, 0.0
        %v378 = vadd.f32 %v376, %v377
        %v379 = vrot.slane %v378, 4
        %v380 = vadd.f32 %v378, %v379
        %v381 = vrot.slane %v380, 2
        %v382 = vadd.f32 %v380, %v381
        %v383 = vrot.slane %v382, 1
        %v384 = vadd.f32 %v382, %v383
        %v385 = vadd.f32 %v250, %v384
        %vm386 = vcmask 122880
        %387 = vst.msk [vmem:[%s162] sm:$0x1] %vm386, %v385
        %v388 = vld [vmem:[%s168] sm:$0x1]
        %v389 = vmul.f32 %v186, %v186
        %v390 = vmul.f32 %v187, %v187
        %v391 = vmul.f32 %v188, %v188
        %v392 = vmul.f32 %v189, %v189
        %v393 = vmul.f32 %v190, %v190
        %v394 = vmul.f32 %v191, %v191
        %v395 = vmul.f32 %v192, %v192
        %v396 = vmul.f32 %v193, %v193
        %v397 = vmul.f32 %v194, %v194
        %v398 = vmul.f32 %v195, %v195
        %v399 = vmul.f32 %v196, %v196
        %v400 = vmul.f32 %v197, %v197
        %v401 = vmul.f32 %v198, %v198
        %v402 = vmul.f32 %v199, %v199
        %v403 = vmul.f32 %v200, %v200
        %v404 = vmul.f32 %v201, %v201
        %v405 = vmul.f32 %v202, %v202
        %v406 = vmul.f32 %v203, %v203
        %v407 = vmul.f32 %v204, %v204
        %v408 = vmul.f32 %v205, %v205
        %v409 = vmul.f32 %v206, %v206
        %v410 = vmul.f32 %v207, %v207
        %v411 = vmul.f32 %v208, %v208
        %v412 = vmul.f32 %v209, %v209
        %v413 = vmul.f32 %v210, %v210
        %v414 = vmul.f32 %v211, %v211
        %v415 = vmul.f32 %v212, %v212
        %v416 = vmul.f32 %v213, %v213
        %v417 = vmul.f32 %v214, %v214
        %v418 = vmul.f32 %v215, %v215
        %v419 = vmul.f32 %v216, %v216
        %v420 = vmul.f32 %v217, %v217
        %v421 = vmul.f32 %v218, %v218
        %v422 = vmul.f32 %v219, %v219
        %v423 = vmul.f32 %v220, %v220
        %v424 = vmul.f32 %v221, %v221
        %v425 = vmul.f32 %v222, %v222
        %v426 = vmul.f32 %v223, %v223
        %v427 = vmul.f32 %v224, %v224
        %v428 = vmul.f32 %v225, %v225
        %v429 = vmul.f32 %v226, %v226
        %v430 = vmul.f32 %v227, %v227
        %v431 = vmul.f32 %v228, %v228
        %v432 = vmul.f32 %v229, %v229
        %v433 = vmul.f32 %v230, %v230
        %v434 = vmul.f32 %v231, %v231
        %v435 = vmul.f32 %v232, %v232
        %v436 = vmul.f32 %v233, %v233
        %v437 = vmul.f32 %v234, %v234
        %v438 = vmul.f32 %v235, %v235
        %v439 = vmul.f32 %v236, %v236
        %v440 = vmul.f32 %v237, %v237
        %v441 = vmul.f32 %v238, %v238
        %v442 = vmul.f32 %v239, %v239
        %v443 = vmul.f32 %v240, %v240
        %v444 = vmul.f32 %v241, %v241
        %v445 = vmul.f32 %v242, %v242
        %v446 = vmul.f32 %v243, %v243
        %v447 = vmul.f32 %v244, %v244
        %v448 = vmul.f32 %v245, %v245
        %v449 = vmul.f32 %v246, %v246
        %v450 = vmul.f32 %v247, %v247
        %v451 = vmul.f32 %v248, %v248
        %v452 = vmul.f32 %v249, %v249
        %v453 = vsel %vm251, %v389, 0.0
        %v454 = vsel %vm251, %v390, 0.0
        %v455 = vadd.f32 %v453, %v454
        %v456 = vsel %vm251, %v391, 0.0
        %v457 = vadd.f32 %v455, %v456
        %v458 = vsel %vm251, %v392, 0.0
        %v459 = vadd.f32 %v457, %v458
        %v460 = vsel %vm251, %v393, 0.0
        %v461 = vadd.f32 %v459, %v460
        %v462 = vsel %vm251, %v394, 0.0
        %v463 = vadd.f32 %v461, %v462
        %v464 = vsel %vm251, %v395, 0.0
        %v465 = vadd.f32 %v463, %v464
        %v466 = vsel %vm251, %v396, 0.0
        %v467 = vadd.f32 %v465, %v466
        %v468 = vsel %vm251, %v397, 0.0
        %v469 = vadd.f32 %v467, %v468
        %v470 = vsel %vm251, %v398, 0.0
        %v471 = vadd.f32 %v469, %v470
        %v472 = vsel %vm251, %v399, 0.0
        %v473 = vadd.f32 %v471, %v472
        %v474 = vsel %vm251, %v400, 0.0
        %v475 = vadd.f32 %v473, %v474
        %v476 = vsel %vm251, %v401, 0.0
        %v477 = vadd.f32 %v475, %v476
        %v478 = vsel %vm251, %v402, 0.0
        %v479 = vadd.f32 %v477, %v478
        %v480 = vsel %vm251, %v403, 0.0
        %v481 = vadd.f32 %v479, %v480
        %v482 = vsel %vm251, %v404, 0.0
        %v483 = vadd.f32 %v481, %v482
        %v484 = vsel %vm251, %v405, 0.0
        %v485 = vadd.f32 %v483, %v484
        %v486 = vsel %vm251, %v406, 0.0
        %v487 = vadd.f32 %v485, %v486
        %v488 = vsel %vm251, %v407, 0.0
        %v489 = vadd.f32 %v487, %v488
        %v490 = vsel %vm251, %v408, 0.0
        %v491 = vadd.f32 %v489, %v490
        %v492 = vsel %vm251, %v409, 0.0
        %v493 = vadd.f32 %v491, %v492
        %v494 = vsel %vm251, %v410, 0.0
        %v495 = vadd.f32 %v493, %v494
        %v496 = vsel %vm251, %v411, 0.0
        %v497 = vadd.f32 %v495, %v496
        %v498 = vsel %vm251, %v412, 0.0
        %v499 = vadd.f32 %v497, %v498
        %v500 = vsel %vm251, %v413, 0.0
        %v501 = vadd.f32 %v499, %v500
        %v502 = vsel %vm251, %v414, 0.0
        %v503 = vadd.f32 %v501, %v502
        %v504 = vsel %vm251, %v415, 0.0
        %v505 = vadd.f32 %v503, %v504
        %v506 = vsel %vm251, %v416, 0.0
        %v507 = vadd.f32 %v505, %v506
        %v508 = vsel %vm251, %v417, 0.0
        %v509 = vadd.f32 %v507, %v508
        %v510 = vsel %vm251, %v418, 0.0
        %v511 = vadd.f32 %v509, %v510
        %v512 = vsel %vm251, %v419, 0.0
        %v513 = vadd.f32 %v511, %v512
        %v514 = vsel %vm251, %v420, 0.0
        %v515 = vadd.f32 %v513, %v514
        %v516 = vsel %vm251, %v421, 0.0
        %v517 = vadd.f32 %v515, %v516
        %v518 = vsel %vm251, %v422, 0.0
        %v519 = vadd.f32 %v517, %v518
        %v520 = vsel %vm251, %v423, 0.0
        %v521 = vadd.f32 %v519, %v520
        %v522 = vsel %vm251, %v424, 0.0
        %v523 = vadd.f32 %v521, %v522
        %v524 = vsel %vm251, %v425, 0.0
        %v525 = vadd.f32 %v523, %v524
        %v526 = vsel %vm251, %v426, 0.0
        %v527 = vadd.f32 %v525, %v526
        %v528 = vsel %vm251, %v427, 0.0
        %v529 = vadd.f32 %v527, %v528
        %v530 = vsel %vm251, %v428, 0.0
        %v531 = vadd.f32 %v529, %v530
        %v532 = vsel %vm251, %v429, 0.0
        %v533 = vadd.f32 %v531, %v532
        %v534 = vsel %vm251, %v430, 0.0
        %v535 = vadd.f32 %v533, %v534
        %v536 = vsel %vm251, %v431, 0.0
        %v537 = vadd.f32 %v535, %v536
        %v538 = vsel %vm251, %v432, 0.0
        %v539 = vadd.f32 %v537, %v538
        %v540 = vsel %vm251, %v433, 0.0
        %v541 = vadd.f32 %v539, %v540
        %v542 = vsel %vm251, %v434, 0.0
        %v543 = vadd.f32 %v541, %v542
        %v544 = vsel %vm251, %v435, 0.0
        %v545 = vadd.f32 %v543, %v544
        %v546 = vsel %vm251, %v436, 0.0
        %v547 = vadd.f32 %v545, %v546
        %v548 = vsel %vm251, %v437, 0.0
        %v549 = vadd.f32 %v547, %v548
        %v550 = vsel %vm251, %v438, 0.0
        %v551 = vadd.f32 %v549, %v550
        %v552 = vsel %vm251, %v439, 0.0
        %v553 = vadd.f32 %v551, %v552
        %v554 = vsel %vm251, %v440, 0.0
        %v555 = vadd.f32 %v553, %v554
        %v556 = vsel %vm251, %v441, 0.0
        %v557 = vadd.f32 %v555, %v556
        %v558 = vsel %vm251, %v442, 0.0
        %v559 = vadd.f32 %v557, %v558
        %v560 = vsel %vm251, %v443, 0.0
        %v561 = vadd.f32 %v559, %v560
        %v562 = vsel %vm251, %v444, 0.0
        %v563 = vadd.f32 %v561, %v562
        %v564 = vsel %vm251, %v445, 0.0
        %v565 = vadd.f32 %v563, %v564
        %v566 = vsel %vm251, %v446, 0.0
        %v567 = vadd.f32 %v565, %v566
        %v568 = vsel %vm251, %v447, 0.0
        %v569 = vadd.f32 %v567, %v568
        %v570 = vsel %vm251, %v448, 0.0
        %v571 = vadd.f32 %v569, %v570
        %v572 = vsel %vm251, %v449, 0.0
        %v573 = vadd.f32 %v571, %v572
        %v574 = vsel %vm251, %v450, 0.0
        %v575 = vadd.f32 %v573, %v574
        %v576 = vsel %vm251, %v451, 0.0
        %v577 = vadd.f32 %v575, %v576
        %v578 = vsel %vm251, %v452, 0.0
        %v579 = vadd.f32 %v577, %v578
        %v580 = vrot.slane %v579, 4
        %v581 = vadd.f32 %v579, %v580
        %v582 = vrot.slane %v581, 2
        %v583 = vadd.f32 %v581, %v582
        %v584 = vrot.slane %v583, 1
        %v585 = vadd.f32 %v583, %v584
        %v586 = vadd.f32 %v388, %v585
        %587 = vst.msk [vmem:[%s168] sm:$0x1] %vm386, %v586
        %s588 = sand.u32 %s68, 1
        %s589 = scalar_lea.sflag [#allocation3], %s588
        %s590 = sand.u32 %s68, 1
        %s591 = scalar_lea.vmem [#allocation2], %s590
        %s592 = sand.u32 %s94, 1
        %s593 = scalar_lea.sflag [#allocation5], %s592
        %s594 = sand.u32 %s94, 1
        %s595 = scalar_lea.vmem [#allocation4], %s594
        // Predicated region
        $region29: #{tpu_custom_call.1} parent=23 // pred_check
          %p596 = pneg %p78
        $region30: #{tpu_custom_call.1} parent=23 // pred_check_branch
          %598 = sbr.rel (%p596) target = $region32
        $region31: #{tpu_custom_call.1} parent=23 // pred_region
          %s600 = ssub.s32 16, 16
          %601 = vsyncadd %s589, %s600
          %s602 = smul.addr %s24, 16
          %s603 = scalar_lea.hbm %s1, %s602
          %s605 = sshll.u32 %s591, 4
          %s606 = int_to_ptr.vmem [resolvable:$true] %s605
          %608 = dma.vmem_to_hbm [thread:$0]  %s606, 16, %s603, %s589
        $region32: #{tpu_custom_call.1} parent=23 // pred_fallthru
          _
        // Predicated region
        $region33: #{tpu_custom_call.1} parent=23 // pred_check
          %p609 = pneg %p104
        $region34: #{tpu_custom_call.1} parent=23 // pred_check_branch
          %611 = sbr.rel (%p609) target = $region36
        $region35: #{tpu_custom_call.1} parent=23 // pred_region
          %s613 = ssub.s32 16, 16
          %614 = vsyncadd %s593, %s613
          %s615 = smul.addr %s24, 16
          %s616 = scalar_lea.hbm %s2, %s615
          %s618 = sshll.u32 %s595, 4
          %s619 = int_to_ptr.vmem [resolvable:$true] %s618
          %621 = dma.vmem_to_hbm [thread:$0]  %s619, 16, %s616, %s593
        $region36: #{tpu_custom_call.1} parent=23 // pred_fallthru
          _
      $region24: #{tpu_custom_call.1} parent=5 // pred_fallthru
        _
      %p622 = scmp.le.s32.totalorder 2, %s15
      // Predicated region
      $region37: #{tpu_custom_call.1} parent=5 // pred_check
        %p623 = pneg %p622
      $region38: #{tpu_custom_call.1} parent=5 // pred_check_branch
        %625 = sbr.rel (%p623) target = $region40
      $region39: #{tpu_custom_call.1} parent=5 // pred_region
        %s626 = ssub.s32 %s15, 2
        // Predicated region
        $region41: #{tpu_custom_call.1} parent=39 // pred_check
          %p627 = pneg %p84
        $region42: #{tpu_custom_call.1} parent=39 // pred_check_branch
          %629 = sbr.rel (%p627) target = $region44
        $region43: #{tpu_custom_call.1} parent=39 // pred_region
          %s630 = sand.u32 %s69, 1
          %s631 = scalar_lea.sflag [#allocation3], %s630
          %s632 = sand.u32 %s69, 1
          %s633 = scalar_lea.vmem [#allocation2], %s632
          %634 = dma.done %s631, 16
        $region44: #{tpu_custom_call.1} parent=39 // pred_fallthru
          _
        // Predicated region
        $region45: #{tpu_custom_call.1} parent=39 // pred_check
          %p635 = pneg %p110
        $region46: #{tpu_custom_call.1} parent=39 // pred_check_branch
          %637 = sbr.rel (%p635) target = $region48
        $region47: #{tpu_custom_call.1} parent=39 // pred_region
          %s638 = sand.u32 %s95, 1
          %s639 = scalar_lea.sflag [#allocation5], %s638
          %s640 = sand.u32 %s95, 1
          %s641 = scalar_lea.vmem [#allocation4], %s640
          %642 = dma.done %s639, 16
        $region48: #{tpu_custom_call.1} parent=39 // pred_fallthru
          _
      $region40: #{tpu_custom_call.1} parent=5 // pred_fallthru
        _
    $region6: #{tpu_custom_call.1} parent=1 // loop_footer
      %s19 = sadd.s32 1, %s15
    $region7: #{tpu_custom_call.1} parent=1 // loop_footer_branch
      %14 = sbr.rel target = $region3
    $region8: #{tpu_custom_call.1} parent=1 // loop_exit
      _
    %643 = vsyncpa [#allocation3], 1
    %s644 = scalar_lea.sflag [#allocation3], 1
    %645 = vsyncpa %s644, 1
    %646 = vsyncpa [#allocation5], 1
    %s647 = scalar_lea.sflag [#allocation5], 1
    %648 = vsyncpa %s647, 1

</llo_original>
